<compile_context>
chip_gen: v5e
topology: v5e:2x2
jax: 0.10.0
libtpu: 0.0.40
codegen_flags: <defaults>
</compile_context>

<pallas_src>
import jax
import jax.numpy as jnp
from jax.experimental import pallas as pl
from jax.experimental.pallas import tpu as pltpu


def _conv_bn_relu_kernel(w_ref, b_ref, x_ref, o_ref):
    # w_ref: (C_out, C_in)  f32  -- conv weight with BN scale pre-folded
    # b_ref: (C_out, 1)     f32  -- folded BN bias
    # x_ref: (C_in, M)      f32  -- full spatial slab of one batch element
    # o_ref: (C_out, M)     f32
    y = jnp.dot(w_ref[...], x_ref[...], preferred_element_type=jnp.float32)
    o_ref[...] = jnp.maximum(y + b_ref[...], 0.0)


def conv1x1_bn_relu(x_nchw, conv_w, gamma, beta, running_mean, running_var,
                    eps=1e-5):
    """x_nchw: (N, C_in, H, W); conv_w: (C_out, C_in, 1, 1). Returns NCHW."""
    N, C_in, H, W = x_nchw.shape
    C_out = conv_w.shape[0]
    M = H * W

    # ---- BN folding (inference semantics, running stats) -------------------
    scale = gamma * jax.lax.rsqrt(running_var + eps)            # (C_out,)
    w2d = conv_w[:, :, 0, 0] * scale[:, None]                   # (C_out, C_in)
    bias = (beta - running_mean * scale).reshape(C_out, 1)      # (C_out, 1)

    # ---- native-layout input slab: (N, C_in, M) -----------------------------
    x3d = x_nchw.reshape(N, C_in, M)                            # free reshape

    out = pl.pallas_call(
        _conv_bn_relu_kernel,
        out_shape=jax.ShapeDtypeStruct((N, C_out, M), jnp.float32),
        grid_spec=pltpu.PrefetchScalarGridSpec(
            num_scalar_prefetch=0,
            grid=(N,),
            in_specs=[
                pl.BlockSpec((C_out, C_in), lambda n: (0, 0)),      # weights
                pl.BlockSpec((C_out, 1), lambda n: (0, 0)),         # bias
                pl.BlockSpec((None, C_in, M), lambda n: (n, 0, 0)),  # x slab
            ],
            out_specs=pl.BlockSpec((None, C_out, M), lambda n: (n, 0, 0)),
        ),
        compiler_params=pltpu.CompilerParams(
            dimension_semantics=("parallel",)),
        cost_estimate=pl.CostEstimate(
            flops=2 * N * C_out * C_in * M,
            transcendentals=0,
            bytes_accessed=4 * (x3d.size + w2d.size + bias.size
                                + N * C_out * M)),
    )(w2d, bias, x3d)

    # back to NCHW (pure reshape, no transpose, no slice)
    return out.reshape(N, C_out, H, W)


def reference(x_nchw, conv_w, gamma, beta, running_mean, running_var, eps=1e-5):
    # pure-JAX reference (same math, no Pallas)
    N, C_in, H, W = x_nchw.shape
    C_out = conv_w.shape[0]
    x2d = jnp.transpose(x_nchw, (0, 2, 3, 1)).reshape(-1, C_in)
    y = x2d @ jnp.transpose(conv_w[:, :, 0, 0], (1, 0))
    scale = gamma / jnp.sqrt(running_var + eps)
    y = y * scale + (beta - running_mean * scale)
    y = jnp.maximum(y, 0.0)
    return jnp.transpose(y.reshape(N, H, W, C_out), (0, 3, 1, 2))


if __name__ == "__main__":
    key = jax.random.PRNGKey(0)
    k_x, k_w, k_g, k_b, k_m, k_v = jax.random.split(key, 6)

    N, C, H, W = 1, 288, 14, 14  # matches the module's fixed shapes
    x = jax.random.normal(k_x, (N, C, H, W), dtype=jnp.float32)
    conv_w = jax.random.normal(k_w, (C, C, 1, 1), dtype=jnp.float32) * 0.05
    gamma = 1.0 + 0.1 * jax.random.normal(k_g, (C,), dtype=jnp.float32)
    beta = 0.1 * jax.random.normal(k_b, (C,), dtype=jnp.float32)
    running_mean = 0.1 * jax.random.normal(k_m, (C,), dtype=jnp.float32)
    running_var = jnp.abs(jax.random.normal(k_v, (C,), dtype=jnp.float32)) + 0.5

    out = conv1x1_bn_relu(x, conv_w, gamma, beta, running_mean, running_var)
    out = jax.block_until_ready(out)

    ref = reference(x, conv_w, gamma, beta, running_mean, running_var)
    assert out.shape == (N, C, H, W)
    assert jnp.allclose(out, ref, atol=1e-4, rtol=1e-4)

    print("KERNEL_OK")
</pallas_src>

<mosaic_0001>
module attributes {stable_mosaic.version = 11 : i64} {
  func.func @_conv_bn_relu_kernel(%arg0: i32, %arg1: memref<288x288xf32, #tpu.memory_space<vmem>>, %arg2: memref<288x1xf32, #tpu.memory_space<vmem>>, %arg3: memref<1x288x196xf32, #tpu.memory_space<vmem>>, %arg4: memref<1x288x196xf32, #tpu.memory_space<vmem>>) attributes {dimension_semantics = [#tpu.dimension_semantics<parallel>], iteration_bounds = array<i64: 1>, scalar_prefetch = 0 : i64, scratch_operands = 0 : i64, tpu.core_type = #tpu.core_type<tc>, window_params = [{pipeline_mode = #tpu.pipeline_mode<synchronous>, transform_indices = @transform_0, window_bounds = array<i64: 288, 288>}, {pipeline_mode = #tpu.pipeline_mode<synchronous>, transform_indices = @transform_1, window_bounds = array<i64: 288, 1>}, {transform_indices = @transform_2, window_bounds = array<i64: 1, 288, 196>}, {transform_indices = @transform_3, window_bounds = array<i64: 1, 288, 196>}]} {
    %c0 = arith.constant 0 : index
    %c0_0 = arith.constant 0 : index
    %0 = vector.load %arg1[%c0, %c0_0] : memref<288x288xf32, #tpu.memory_space<vmem>>, vector<288x288xf32>
    %c0_1 = arith.constant 0 : index
    %c0_2 = arith.constant 0 : index
    %c0_3 = arith.constant 0 : index
    %1 = vector.load %arg3[%c0_1, %c0_2, %c0_3] : memref<1x288x196xf32, #tpu.memory_space<vmem>>, vector<1x288x196xf32>
    %2 = vector.shape_cast %1 : vector<1x288x196xf32> to vector<288x196xf32>
    %cst = arith.constant dense<0.000000e+00> : vector<288x196xf32>
    %3 = tpu.matmul %0, %2, %cst {dimension_numbers = #tpu.dot_dimension_numbers<[1], [0], [0], [1], [0, 0, 1, 1], [], []>} : vector<288x288xf32>, vector<288x196xf32>, vector<288x196xf32> -> vector<288x196xf32>
    %c0_4 = arith.constant 0 : index
    %c0_5 = arith.constant 0 : index
    %4 = vector.load %arg2[%c0_4, %c0_5] : memref<288x1xf32, #tpu.memory_space<vmem>>, vector<288x1xf32>
    %5 = vector.broadcast %4 : vector<288x1xf32> to vector<288x196xf32>
    %6 = arith.addf %3, %5 : vector<288x196xf32>
    %cst_6 = arith.constant 0.000000e+00 : f32
    %7 = vector.broadcast %cst_6 : f32 to vector<288x196xf32>
    %8 = arith.maximumf %6, %7 : vector<288x196xf32>
    %c0_7 = arith.constant 0 : index
    %c0_8 = arith.constant 0 : index
    %c0_9 = arith.constant 0 : index
    %9 = vector.load %arg4[%c0_7, %c0_8, %c0_9] : memref<1x288x196xf32, #tpu.memory_space<vmem>>, vector<1x288x196xf32>
    %10 = vector.shape_cast %9 : vector<1x288x196xf32> to vector<288x196xf32>
    %11 = vector.shape_cast %8 : vector<288x196xf32> to vector<1x288x196xf32>
    tpu.vector_store %arg4[%c0_7, %c0_8, %c0_9], %11 {strides = array<i32>} : memref<1x288x196xf32, #tpu.memory_space<vmem>>, vector<1x288x196xf32>,
    return
  }
  func.func @transform_0(%arg0: i32) -> (i32, i32) {
    %c0_i32 = arith.constant 0 : i32
    %c0_i32_0 = arith.constant 0 : i32
    %c0_i32_1 = arith.constant 0 : i32
    return %c0_i32, %c0_i32_0 : i32, i32
  }
  func.func @transform_1(%arg0: i32) -> (i32, i32) {
    %c0_i32 = arith.constant 0 : i32
    %c0_i32_0 = arith.constant 0 : i32
    %c0_i32_1 = arith.constant 0 : i32
    return %c0_i32, %c0_i32_0 : i32, i32
  }
  func.func @transform_2(%arg0: i32) -> (i32, i32, i32) {
    %c0_i32 = arith.constant 0 : i32
    %c0_i32_0 = arith.constant 0 : i32
    %c0_i32_1 = arith.constant 0 : i32
    return %arg0, %c0_i32, %c0_i32_0 : i32, i32, i32
  }
  func.func @transform_3(%arg0: i32) -> (i32, i32, i32) {
    %c0_i32 = arith.constant 0 : i32
    %c0_i32_0 = arith.constant 0 : i32
    %c0_i32_1 = arith.constant 0 : i32
    return %arg0, %c0_i32, %c0_i32_0 : i32, i32, i32
  }
}

</mosaic_0001>

<llo_original>
// kernel: tpu_custom_call.1
$region0: #{tpu_custom_call.1}
  #allocation0 [shape = 'u32[]', space=smem, size = 0x4, offset = 0x4, fixed_abs, tag = 'smem constant byte address 0x4 - core index']
  #allocation1 [shape = 'u32[72,128]{1,0:T(1,128)}', space=vmem, size = 0x9000, scoped, tag = 'internal scratch']
  %s0 = inlined_call_operand.hbm [shape: f32[288,288], index: 0, kind: input, shape index: {}]
  %s1 = inlined_call_operand.vmem [shape: f32[288,1], index: 1, kind: input, shape index: {}]
  %s2 = inlined_call_operand.hbm [shape: f32[1,288,196], index: 2, kind: input, shape index: {}]
  %s3 = inlined_call_operand.hbm [shape: f32[1,288,196], index: 3, kind: output, shape index: {}]
  %s4 = sld [smem:[#allocation0]]
  $region30: #{tpu_custom_call.1} parent=0
    _
  %s6 = ssub.s32 1, %s4
  %s7 = scalar_select 0, %s6, %s4
  $region1: #{tpu_custom_call.1} parent=0
    #allocation2 [shape = 'u8[442368]{0}', space=vmem, size = 0x6c000, scoped, tag = 'input window, operand 0, single buffered']
    #allocation3 [shape = 's32[1]{0}', space=sflag, size = 0x4, scoped, tag = 'scoped memory for tpu_custom_call.1']
    #allocation4 [shape = 's32[1]{0}', space=sflag, size = 0x4, scoped, tag = 'scoped memory for tpu_custom_call.1']
    #allocation5 [shape = 'u8[294912]{0}', space=vmem, size = 0x48000, scoped, tag = 'input window, operand 2, single buffered']
    #allocation6 [shape = 's32[1]{0}', space=sflag, size = 0x4, scoped, tag = 'scoped memory for tpu_custom_call.1']
    #allocation7 [shape = 'u8[294912]{0}', space=vmem, size = 0x48000, scoped, tag = 'output window, operand 0, single buffered']
    %8 = vsyncpa [#allocation3], 0
    %9 = vsyncpa [#allocation6], 0
    %10 = vsyncpa [#allocation4], 0
    // Predicated region
    $region2: #{tpu_custom_call.1} parent=1 // pred_check
      _
    $region3: #{tpu_custom_call.1} parent=1 // pred_check_branch
      %12 = sbr.rel (0) target = $region5
    $region4: #{tpu_custom_call.1} parent=1 // pred_region
      %14 = vsyncadd [#allocation3], 0
      %s15 = sshll.u32 %s0, 4
      %s16 = int_to_ptr.hbm [resolvable:$true] %s15
      %s17 = sshll.u32 [#allocation2], 4
      %s18 = int_to_ptr.vmem [resolvable:$true] %s17
      %23 = dma.hbm_to_vmem [thread:$0]  %s16, 13824, %s18, [#allocation3], 384, 384, 24
    $region5: #{tpu_custom_call.1} parent=1 // pred_fallthru
      _
    // Predicated region
    $region6: #{tpu_custom_call.1} parent=1 // pred_check
      _
    $region7: #{tpu_custom_call.1} parent=1 // pred_check_branch
      %25 = sbr.rel (0) target = $region9
    $region8: #{tpu_custom_call.1} parent=1 // pred_region
      _
    $region9: #{tpu_custom_call.1} parent=1 // pred_fallthru
      _
    // Predicated region
    $region10: #{tpu_custom_call.1} parent=1 // pred_check
      _
    $region11: #{tpu_custom_call.1} parent=1 // pred_check_branch
      %27 = sbr.rel (0) target = $region13
    $region12: #{tpu_custom_call.1} parent=1 // pred_region
      %29 = vsyncadd [#allocation6], 0
      %s30 = sshll.u32 %s2, 4
      %s31 = int_to_ptr.hbm [resolvable:$true] %s30
      %s32 = sshll.u32 [#allocation5], 4
      %s33 = int_to_ptr.vmem [resolvable:$true] %s32
      %38 = dma.hbm_to_vmem [thread:$0]  %s31, 9216, %s33, [#allocation6], 256, 256, 16
    $region13: #{tpu_custom_call.1} parent=1 // pred_fallthru
      _
    // Predicated region
    $region14: #{tpu_custom_call.1} parent=1 // pred_check
      _
    $region15: #{tpu_custom_call.1} parent=1 // pred_check_branch
      %40 = sbr.rel (0) target = $region17
    $region16: #{tpu_custom_call.1} parent=1 // pred_region
      %42 = dma.done [#allocation3], 13824
    $region17: #{tpu_custom_call.1} parent=1 // pred_fallthru
      _
    // Predicated region
    $region18: #{tpu_custom_call.1} parent=1 // pred_check
      _
    $region19: #{tpu_custom_call.1} parent=1 // pred_check_branch
      %44 = sbr.rel (0) target = $region21
    $region20: #{tpu_custom_call.1} parent=1 // pred_region
      %46 = dma.done [#allocation6], 9216
    $region21: #{tpu_custom_call.1} parent=1 // pred_fallthru
      _
    %v47 = vld [vmem:[#allocation2] sm:$0xff]
    %v48 = vld [vmem:[#allocation2 + $0x8] sm:$0xff]
    %v49 = vld [vmem:[#allocation2 + $0x10] sm:$0xff]
    %v50 = vld [vmem:[#allocation2 + $0x18] sm:$0xff]
    %v51 = vld [vmem:[#allocation2 + $0x20] sm:$0xff]
    %v52 = vld [vmem:[#allocation2 + $0x28] sm:$0xff]
    %v53 = vld [vmem:[#allocation2 + $0x30] sm:$0xff]
    %v54 = vld [vmem:[#allocation2 + $0x38] sm:$0xff]
    %v55 = vld [vmem:[#allocation2 + $0x40] sm:$0xff]
    %v56 = vld [vmem:[#allocation2 + $0x48] sm:$0xff]
    %v57 = vld [vmem:[#allocation2 + $0x50] sm:$0xff]
    %v58 = vld [vmem:[#allocation2 + $0x58] sm:$0xff]
    %v59 = vld [vmem:[#allocation2 + $0x60] sm:$0xff]
    %v60 = vld [vmem:[#allocation2 + $0x68] sm:$0xff]
    %v61 = vld [vmem:[#allocation2 + $0x70] sm:$0xff]
    %v62 = vld [vmem:[#allocation2 + $0x78] sm:$0xff]
    %v63 = vld [vmem:[#allocation2 + $0x80] sm:$0xff]
    %v64 = vld [vmem:[#allocation2 + $0x88] sm:$0xff]
    %v65 = vld [vmem:[#allocation2 + $0x90] sm:$0xff]
    %v66 = vld [vmem:[#allocation2 + $0x98] sm:$0xff]
    %v67 = vld [vmem:[#allocation2 + $0xa0] sm:$0xff]
    %v68 = vld [vmem:[#allocation2 + $0xa8] sm:$0xff]
    %v69 = vld [vmem:[#allocation2 + $0xb0] sm:$0xff]
    %v70 = vld [vmem:[#allocation2 + $0xb8] sm:$0xff]
    %v71 = vld [vmem:[#allocation2 + $0xc0] sm:$0xff]
    %v72 = vld [vmem:[#allocation2 + $0xc8] sm:$0xff]
    %v73 = vld [vmem:[#allocation2 + $0xd0] sm:$0xff]
    %v74 = vld [vmem:[#allocation2 + $0xd8] sm:$0xff]
    %v75 = vld [vmem:[#allocation2 + $0xe0] sm:$0xff]
    %v76 = vld [vmem:[#allocation2 + $0xe8] sm:$0xff]
    %v77 = vld [vmem:[#allocation2 + $0xf0] sm:$0xff]
    %v78 = vld [vmem:[#allocation2 + $0xf8] sm:$0xff]
    %v79 = vld [vmem:[#allocation2 + $0x100] sm:$0xff]
    %v80 = vld [vmem:[#allocation2 + $0x108] sm:$0xff]
    %v81 = vld [vmem:[#allocation2 + $0x110] sm:$0xff]
    %v82 = vld [vmem:[#allocation2 + $0x118] sm:$0xff]
    %v83 = vld [vmem:[#allocation2 + $0x120] sm:$0xff]
    %v84 = vld [vmem:[#allocation2 + $0x128] sm:$0xff]
    %v85 = vld [vmem:[#allocation2 + $0x130] sm:$0xff]
    %v86 = vld [vmem:[#allocation2 + $0x138] sm:$0xff]
    %v87 = vld [vmem:[#allocation2 + $0x140] sm:$0xff]
    %v88 = vld [vmem:[#allocation2 + $0x148] sm:$0xff]
    %v89 = vld [vmem:[#allocation2 + $0x150] sm:$0xff]
    %v90 = vld [vmem:[#allocation2 + $0x158] sm:$0xff]
    %v91 = vld [vmem:[#allocation2 + $0x160] sm:$0xff]
    %v92 = vld [vmem:[#allocation2 + $0x168] sm:$0xff]
    %v93 = vld [vmem:[#allocation2 + $0x170] sm:$0xff]
    %v94 = vld [vmem:[#allocation2 + $0x178] sm:$0xff]
    %v95 = vld [vmem:[#allocation2 + $0x180] sm:$0xff]
    %v96 = vld [vmem:[#allocation2 + $0x188] sm:$0xff]
    %v97 = vld [vmem:[#allocation2 + $0x190] sm:$0xff]
    %v98 = vld [vmem:[#allocation2 + $0x198] sm:$0xff]
    %v99 = vld [vmem:[#allocation2 + $0x1a0] sm:$0xff]
    %v100 = vld [vmem:[#allocation2 + $0x1a8] sm:$0xff]
    %v101 = vld [vmem:[#allocation2 + $0x1b0] sm:$0xff]
    %v102 = vld [vmem:[#allocation2 + $0x1b8] sm:$0xff]
    %v103 = vld [vmem:[#allocation2 + $0x1c0] sm:$0xff]
    %v104 = vld [vmem:[#allocation2 + $0x1c8] sm:$0xff]
    %v105 = vld [vmem:[#allocation2 + $0x1d0] sm:$0xff]
    %v106 = vld [vmem:[#allocation2 + $0x1d8] sm:$0xff]
    %v107 = vld [vmem:[#allocation2 + $0x1e0] sm:$0xff]
    %v108 = vld [vmem:[#allocation2 + $0x1e8] sm:$0xff]
    %v109 = vld [vmem:[#allocation2 + $0x1f0] sm:$0xff]
    %v110 = vld [vmem:[#allocation2 + $0x1f8] sm:$0xff]
    %v111 = vld [vmem:[#allocation2 + $0x200] sm:$0xff]
    %v112 = vld [vmem:[#allocation2 + $0x208] sm:$0xff]
    %v113 = vld [vmem:[#allocation2 + $0x210] sm:$0xff]
    %v114 = vld [vmem:[#allocation2 + $0x218] sm:$0xff]
    %v115 = vld [vmem:[#allocation2 + $0x220] sm:$0xff]
    %v116 = vld [vmem:[#allocation2 + $0x228] sm:$0xff]
    %v117 = vld [vmem:[#allocation2 + $0x230] sm:$0xff]
    %v118 = vld [vmem:[#allocation2 + $0x238] sm:$0xff]
    %v119 = vld [vmem:[#allocation2 + $0x240] sm:$0xff]
    %v120 = vld [vmem:[#allocation2 + $0x248] sm:$0xff]
    %v121 = vld [vmem:[#allocation2 + $0x250] sm:$0xff]
    %v122 = vld [vmem:[#allocation2 + $0x258] sm:$0xff]
    %v123 = vld [vmem:[#allocation2 + $0x260] sm:$0xff]
    %v124 = vld [vmem:[#allocation2 + $0x268] sm:$0xff]
    %v125 = vld [vmem:[#allocation2 + $0x270] sm:$0xff]
    %v126 = vld [vmem:[#allocation2 + $0x278] sm:$0xff]
    %v127 = vld [vmem:[#allocation2 + $0x280] sm:$0xff]
    %v128 = vld [vmem:[#allocation2 + $0x288] sm:$0xff]
    %v129 = vld [vmem:[#allocation2 + $0x290] sm:$0xff]
    %v130 = vld [vmem:[#allocation2 + $0x298] sm:$0xff]
    %v131 = vld [vmem:[#allocation2 + $0x2a0] sm:$0xff]
    %v132 = vld [vmem:[#allocation2 + $0x2a8] sm:$0xff]
    %v133 = vld [vmem:[#allocation2 + $0x2b0] sm:$0xff]
    %v134 = vld [vmem:[#allocation2 + $0x2b8] sm:$0xff]
    %v135 = vld [vmem:[#allocation2 + $0x2c0] sm:$0xff]
    %v136 = vld [vmem:[#allocation2 + $0x2c8] sm:$0xff]
    %v137 = vld [vmem:[#allocation2 + $0x2d0] sm:$0xff]
    %v138 = vld [vmem:[#allocation2 + $0x2d8] sm:$0xff]
    %v139 = vld [vmem:[#allocation2 + $0x2e0] sm:$0xff]
    %v140 = vld [vmem:[#allocation2 + $0x2e8] sm:$0xff]
    %v141 = vld [vmem:[#allocation2 + $0x2f0] sm:$0xff]
    %v142 = vld [vmem:[#allocation2 + $0x2f8] sm:$0xff]
    %v143 = vld [vmem:[#allocation2 + $0x300] sm:$0xff]
    %v144 = vld [vmem:[#allocation2 + $0x308] sm:$0xff]
    %v145 = vld [vmem:[#allocation2 + $0x310] sm:$0xff]
    %v146 = vld [vmem:[#allocation2 + $0x318] sm:$0xff]
    %v147 = vld [vmem:[#allocation2 + $0x320] sm:$0xff]
    %v148 = vld [vmem:[#allocation2 + $0x328] sm:$0xff]
    %v149 = vld [vmem:[#allocation2 + $0x330] sm:$0xff]
    %v150 = vld [vmem:[#allocation2 + $0x338] sm:$0xff]
    %v151 = vld [vmem:[#allocation2 + $0x340] sm:$0xff]
    %v152 = vld [vmem:[#allocation2 + $0x348] sm:$0xff]
    %v153 = vld [vmem:[#allocation2 + $0x350] sm:$0xff]
    %v154 = vld [vmem:[#allocation2 + $0x358] sm:$0xff]
    %v155 = vld [vmem:[#allocation5] sm:$0xff]
    %v156 = vld [vmem:[#allocation5 + $0x8] sm:$0xff]
    %v157 = vld [vmem:[#allocation5 + $0x10] sm:$0xff]
    %v158 = vld [vmem:[#allocation5 + $0x18] sm:$0xff]
    %v159 = vld [vmem:[#allocation5 + $0x20] sm:$0xff]
    %v160 = vld [vmem:[#allocation5 + $0x28] sm:$0xff]
    %v161 = vld [vmem:[#allocation5 + $0x30] sm:$0xff]
    %v162 = vld [vmem:[#allocation5 + $0x38] sm:$0xff]
    %v163 = vld [vmem:[#allocation5 + $0x40] sm:$0xff]
    %v164 = vld [vmem:[#allocation5 + $0x48] sm:$0xff]
    %v165 = vld [vmem:[#allocation5 + $0x50] sm:$0xff]
    %v166 = vld [vmem:[#allocation5 + $0x58] sm:$0xff]
    %v167 = vld [vmem:[#allocation5 + $0x60] sm:$0xff]
    %v168 = vld [vmem:[#allocation5 + $0x68] sm:$0xff]
    %v169 = vld [vmem:[#allocation5 + $0x70] sm:$0xff]
    %v170 = vld [vmem:[#allocation5 + $0x78] sm:$0xff]
    %v171 = vld [vmem:[#allocation5 + $0x80] sm:$0xff]
    %v172 = vld [vmem:[#allocation5 + $0x88] sm:$0xff]
    %v173 = vld [vmem:[#allocation5 + $0x90] sm:$0xff]
    %v174 = vld [vmem:[#allocation5 + $0x98] sm:$0xff]
    %v175 = vld [vmem:[#allocation5 + $0xa0] sm:$0xff]
    %v176 = vld [vmem:[#allocation5 + $0xa8] sm:$0xff]
    %v177 = vld [vmem:[#allocation5 + $0xb0] sm:$0xff]
    %v178 = vld [vmem:[#allocation5 + $0xb8] sm:$0xff]
    %v179 = vld [vmem:[#allocation5 + $0xc0] sm:$0xff]
    %v180 = vld [vmem:[#allocation5 + $0xc8] sm:$0xff]
    %v181 = vld [vmem:[#allocation5 + $0xd0] sm:$0xff]
    %v182 = vld [vmem:[#allocation5 + $0xd8] sm:$0xff]
    %v183 = vld [vmem:[#allocation5 + $0xe0] sm:$0xff]
    %v184 = vld [vmem:[#allocation5 + $0xe8] sm:$0xff]
    %v185 = vld [vmem:[#allocation5 + $0xf0] sm:$0xff]
    %v186 = vld [vmem:[#allocation5 + $0xf8] sm:$0xff]
    %v187 = vld [vmem:[#allocation5 + $0x100] sm:$0xff]
    %v188 = vld [vmem:[#allocation5 + $0x108] sm:$0xff]
    %v189 = vld [vmem:[#allocation5 + $0x110] sm:$0xff]
    %v190 = vld [vmem:[#allocation5 + $0x118] sm:$0xff]
    %v191 = vld [vmem:[#allocation5 + $0x120] sm:$0xff]
    %v192 = vld [vmem:[#allocation5 + $0x128] sm:$0xff]
    %v193 = vld [vmem:[#allocation5 + $0x130] sm:$0xff]
    %v194 = vld [vmem:[#allocation5 + $0x138] sm:$0xff]
    %v195 = vld [vmem:[#allocation5 + $0x140] sm:$0xff]
    %v196 = vld [vmem:[#allocation5 + $0x148] sm:$0xff]
    %v197 = vld [vmem:[#allocation5 + $0x150] sm:$0xff]
    %v198 = vld [vmem:[#allocation5 + $0x158] sm:$0xff]
    %v199 = vld [vmem:[#allocation5 + $0x160] sm:$0xff]
    %v200 = vld [vmem:[#allocation5 + $0x168] sm:$0xff]
    %v201 = vld [vmem:[#allocation5 + $0x170] sm:$0xff]
    %v202 = vld [vmem:[#allocation5 + $0x178] sm:$0xff]
    %v203 = vld [vmem:[#allocation5 + $0x180] sm:$0xff]
    %v204 = vld [vmem:[#allocation5 + $0x188] sm:$0xff]
    %v205 = vld [vmem:[#allocation5 + $0x190] sm:$0xff]
    %v206 = vld [vmem:[#allocation5 + $0x198] sm:$0xff]
    %v207 = vld [vmem:[#allocation5 + $0x1a0] sm:$0xff]
    %v208 = vld [vmem:[#allocation5 + $0x1a8] sm:$0xff]
    %v209 = vld [vmem:[#allocation5 + $0x1b0] sm:$0xff]
    %v210 = vld [vmem:[#allocation5 + $0x1b8] sm:$0xff]
    %v211 = vld [vmem:[#allocation5 + $0x1c0] sm:$0xff]
    %v212 = vld [vmem:[#allocation5 + $0x1c8] sm:$0xff]
    %v213 = vld [vmem:[#allocation5 + $0x1d0] sm:$0xff]
    %v214 = vld [vmem:[#allocation5 + $0x1d8] sm:$0xff]
    %v215 = vld [vmem:[#allocation5 + $0x1e0] sm:$0xff]
    %v216 = vld [vmem:[#allocation5 + $0x1e8] sm:$0xff]
    %v217 = vld [vmem:[#allocation5 + $0x1f0] sm:$0xff]
    %v218 = vld [vmem:[#allocation5 + $0x1f8] sm:$0xff]
    %v219 = vld [vmem:[#allocation5 + $0x200] sm:$0xff]
    %v220 = vld [vmem:[#allocation5 + $0x208] sm:$0xff]
    %v221 = vld [vmem:[#allocation5 + $0x210] sm:$0xff]
    %v222 = vld [vmem:[#allocation5 + $0x218] sm:$0xff]
    %v223 = vld [vmem:[#allocation5 + $0x220] sm:$0xff]
    %v224 = vld [vmem:[#allocation5 + $0x228] sm:$0xff]
    %v225 = vld [vmem:[#allocation5 + $0x230] sm:$0xff]
    %v226 = vld [vmem:[#allocation5 + $0x238] sm:$0xff]
    %v227 = vld [vmem:[%s1] sm:$0xff]
    %v228 = vld [vmem:[%s1 + $0x8] sm:$0xff]
    %v229 = vld [vmem:[%s1 + $0x10] sm:$0xff]
    %v230 = vld [vmem:[%s1 + $0x18] sm:$0xff]
    %v231 = vld [vmem:[%s1 + $0x20] sm:$0xff]
    %v232 = vld [vmem:[%s1 + $0x28] sm:$0xff]
    %v233 = vld [vmem:[%s1 + $0x30] sm:$0xff]
    %v234 = vld [vmem:[%s1 + $0x38] sm:$0xff]
    %v235 = vld [vmem:[%s1 + $0x40] sm:$0xff]
    %v236 = vld [vmem:[%s1 + $0x48] sm:$0xff]
    %v237 = vld [vmem:[%s1 + $0x50] sm:$0xff]
    %v238 = vld [vmem:[%s1 + $0x58] sm:$0xff]
    %v239 = vld [vmem:[%s1 + $0x60] sm:$0xff]
    %v240 = vld [vmem:[%s1 + $0x68] sm:$0xff]
    %v241 = vld [vmem:[%s1 + $0x70] sm:$0xff]
    %v242 = vld [vmem:[%s1 + $0x78] sm:$0xff]
    %v243 = vld [vmem:[%s1 + $0x80] sm:$0xff]
    %v244 = vld [vmem:[%s1 + $0x88] sm:$0xff]
    %v245 = vld [vmem:[%s1 + $0x90] sm:$0xff]
    %v246 = vld [vmem:[%s1 + $0x98] sm:$0xff]
    %v247 = vld [vmem:[%s1 + $0xa0] sm:$0xff]
    %v248 = vld [vmem:[%s1 + $0xa8] sm:$0xff]
    %v249 = vld [vmem:[%s1 + $0xb0] sm:$0xff]
    %v250 = vld [vmem:[%s1 + $0xb8] sm:$0xff]
    %v251 = vld [vmem:[%s1 + $0xc0] sm:$0xff]
    %v252 = vld [vmem:[%s1 + $0xc8] sm:$0xff]
    %v253 = vld [vmem:[%s1 + $0xd0] sm:$0xff]
    %v254 = vld [vmem:[%s1 + $0xd8] sm:$0xff]
    %v255 = vld [vmem:[%s1 + $0xe0] sm:$0xff]
    %v256 = vld [vmem:[%s1 + $0xe8] sm:$0xff]
    %v257 = vld [vmem:[%s1 + $0xf0] sm:$0xff]
    %v258 = vld [vmem:[%s1 + $0xf8] sm:$0xff]
    %v259 = vld [vmem:[%s1 + $0x100] sm:$0xff]
    %v260 = vld [vmem:[%s1 + $0x108] sm:$0xff]
    %v261 = vld [vmem:[%s1 + $0x110] sm:$0xff]
    %v262 = vld [vmem:[%s1 + $0x118] sm:$0xff]
    %264 = vset.pattern.permute.xlu0 0
    %265 = vperm.xlu0 %264, %v227
    %v266 = vpop.permute.xlu0 %265
    %269 = vset.pattern.permute.xlu0 0
    %270 = vperm.xlu0 %269, %v228
    %v271 = vpop.permute.xlu0 %270
    %274 = vset.pattern.permute.xlu0 0
    %275 = vperm.xlu0 %274, %v229
    %v276 = vpop.permute.xlu0 %275
    %279 = vset.pattern.permute.xlu0 0
    %280 = vperm.xlu0 %279, %v230
    %v281 = vpop.permute.xlu0 %280
    %284 = vset.pattern.permute.xlu0 0
    %285 = vperm.xlu0 %284, %v231
    %v286 = vpop.permute.xlu0 %285
    %289 = vset.pattern.permute.xlu0 0
    %290 = vperm.xlu0 %289, %v232
    %v291 = vpop.permute.xlu0 %290
    %294 = vset.pattern.permute.xlu0 0
    %295 = vperm.xlu0 %294, %v233
    %v296 = vpop.permute.xlu0 %295
    %299 = vset.pattern.permute.xlu0 0
    %300 = vperm.xlu0 %299, %v234
    %v301 = vpop.permute.xlu0 %300
    %304 = vset.pattern.permute.xlu0 0
    %305 = vperm.xlu0 %304, %v235
    %v306 = vpop.permute.xlu0 %305
    %309 = vset.pattern.permute.xlu0 0
    %310 = vperm.xlu0 %309, %v236
    %v311 = vpop.permute.xlu0 %310
    %314 = vset.pattern.permute.xlu0 0
    %315 = vperm.xlu0 %314, %v237
    %v316 = vpop.permute.xlu0 %315
    %319 = vset.pattern.permute.xlu0 0
    %320 = vperm.xlu0 %319, %v238
    %v321 = vpop.permute.xlu0 %320
    %324 = vset.pattern.permute.xlu0 0
    %325 = vperm.xlu0 %324, %v239
    %v326 = vpop.permute.xlu0 %325
    %329 = vset.pattern.permute.xlu0 0
    %330 = vperm.xlu0 %329, %v240
    %v331 = vpop.permute.xlu0 %330
    %334 = vset.pattern.permute.xlu0 0
    %335 = vperm.xlu0 %334, %v241
    %v336 = vpop.permute.xlu0 %335
    %339 = vset.pattern.permute.xlu0 0
    %340 = vperm.xlu0 %339, %v242
    %v341 = vpop.permute.xlu0 %340
    %344 = vset.pattern.permute.xlu0 0
    %345 = vperm.xlu0 %344, %v243
    %v346 = vpop.permute.xlu0 %345
    %349 = vset.pattern.permute.xlu0 0
    %350 = vperm.xlu0 %349, %v244
    %v351 = vpop.permute.xlu0 %350
    %354 = vset.pattern.permute.xlu0 0
    %355 = vperm.xlu0 %354, %v245
    %v356 = vpop.permute.xlu0 %355
    %359 = vset.pattern.permute.xlu0 0
    %360 = vperm.xlu0 %359, %v246
    %v361 = vpop.permute.xlu0 %360
    %364 = vset.pattern.permute.xlu0 0
    %365 = vperm.xlu0 %364, %v247
    %v366 = vpop.permute.xlu0 %365
    %369 = vset.pattern.permute.xlu0 0
    %370 = vperm.xlu0 %369, %v248
    %v371 = vpop.permute.xlu0 %370
    %374 = vset.pattern.permute.xlu0 0
    %375 = vperm.xlu0 %374, %v249
    %v376 = vpop.permute.xlu0 %375
    %379 = vset.pattern.permute.xlu0 0
    %380 = vperm.xlu0 %379, %v250
    %v381 = vpop.permute.xlu0 %380
    %384 = vset.pattern.permute.xlu0 0
    %385 = vperm.xlu0 %384, %v251
    %v386 = vpop.permute.xlu0 %385
    %389 = vset.pattern.permute.xlu0 0
    %390 = vperm.xlu0 %389, %v252
    %v391 = vpop.permute.xlu0 %390
    %394 = vset.pattern.permute.xlu0 0
    %395 = vperm.xlu0 %394, %v253
    %v396 = vpop.permute.xlu0 %395
    %399 = vset.pattern.permute.xlu0 0
    %400 = vperm.xlu0 %399, %v254
    %v401 = vpop.permute.xlu0 %400
    %404 = vset.pattern.permute.xlu0 0
    %405 = vperm.xlu0 %404, %v255
    %v406 = vpop.permute.xlu0 %405
    %409 = vset.pattern.permute.xlu0 0
    %410 = vperm.xlu0 %409, %v256
    %v411 = vpop.permute.xlu0 %410
    %414 = vset.pattern.permute.xlu0 0
    %415 = vperm.xlu0 %414, %v257
    %v416 = vpop.permute.xlu0 %415
    %419 = vset.pattern.permute.xlu0 0
    %420 = vperm.xlu0 %419, %v258
    %v421 = vpop.permute.xlu0 %420
    %424 = vset.pattern.permute.xlu0 0
    %425 = vperm.xlu0 %424, %v259
    %v426 = vpop.permute.xlu0 %425
    %429 = vset.pattern.permute.xlu0 0
    %430 = vperm.xlu0 %429, %v260
    %v431 = vpop.permute.xlu0 %430
    %434 = vset.pattern.permute.xlu0 0
    %435 = vperm.xlu0 %434, %v261
    %v436 = vpop.permute.xlu0 %435
    %439 = vset.pattern.permute.xlu0 0
    %440 = vperm.xlu0 %439, %v262
    %v441 = vpop.permute.xlu0 %440
    %vm443 = vcmask 261120
    %v445 = vsel %vm443, %v49, 0
    %v448 = vsel %vm443, %v52, 0
    %v451 = vsel %vm443, %v55, 0
    %v454 = vsel %vm443, %v58, 0
    %v457 = vsel %vm443, %v61, 0
    %v460 = vsel %vm443, %v64, 0
    %v463 = vsel %vm443, %v67, 0
    %v466 = vsel %vm443, %v70, 0
    %v469 = vsel %vm443, %v73, 0
    %v472 = vsel %vm443, %v76, 0
    %v475 = vsel %vm443, %v79, 0
    %v478 = vsel %vm443, %v82, 0
    %v481 = vsel %vm443, %v85, 0
    %v484 = vsel %vm443, %v88, 0
    %v487 = vsel %vm443, %v91, 0
    %v490 = vsel %vm443, %v94, 0
    %v493 = vsel %vm443, %v97, 0
    %v496 = vsel %vm443, %v100, 0
    %v499 = vsel %vm443, %v103, 0
    %v502 = vsel %vm443, %v106, 0
    %v505 = vsel %vm443, %v109, 0
    %v508 = vsel %vm443, %v112, 0
    %v511 = vsel %vm443, %v115, 0
    %v514 = vsel %vm443, %v118, 0
    %v517 = vsel %vm443, %v121, 0
    %v520 = vsel %vm443, %v124, 0
    %v523 = vsel %vm443, %v127, 0
    %v526 = vsel %vm443, %v130, 0
    %v529 = vsel %vm443, %v133, 0
    %v532 = vsel %vm443, %v136, 0
    %v535 = vsel %vm443, %v139, 0
    %v538 = vsel %vm443, %v142, 0
    %v541 = vsel %vm443, %v145, 0
    %v544 = vsel %vm443, %v148, 0
    %v547 = vsel %vm443, %v151, 0
    %v550 = vsel %vm443, %v154, 0
    %552 = vmatpush.msra.mxu0 %v185
    %553 = vmatpush.msra.mxu0 %v183
    %554 = vmatpush.msra.mxu0 %v181
    %555 = vmatpush.msra.mxu0 %v179
    %556 = vmatpush.msra.mxu0 %v177
    %557 = vmatpush.msra.mxu0 %v175
    %558 = vmatpush.msra.mxu0 %v173
    %559 = vmatpush.msra.mxu0 %v171
    %560 = vmatpush.msra.mxu0 %v169
    %561 = vmatpush.msra.mxu0 %v167
    %562 = vmatpush.msra.mxu0 %v165
    %563 = vmatpush.msra.mxu0 %v163
    %564 = vmatpush.msra.mxu0 %v161
    %565 = vmatpush.msra.mxu0 %v159
    %566 = vmatpush.msra.mxu0 %v157
    %567 = vmatpush.msra.mxu0 %v155
    %568 = vmatmul.f32.gmra.mxu0 %v47
    %v569 = vpop.f32.mrf.mxu0
    %v570 = vadd.f32 %v266, %v569
    %571 = vmatmul.f32.gmra.mxu0 %v50
    %v572 = vpop.f32.mrf.mxu0
    %v573 = vadd.f32 %v271, %v572
    %574 = vmatmul.f32.gmra.mxu0 %v53
    %v575 = vpop.f32.mrf.mxu0
    %v576 = vadd.f32 %v276, %v575
    %577 = vmatmul.f32.gmra.mxu0 %v56
    %v578 = vpop.f32.mrf.mxu0
    %v579 = vadd.f32 %v281, %v578
    %580 = vmatmul.f32.gmra.mxu0 %v59
    %v581 = vpop.f32.mrf.mxu0
    %v582 = vadd.f32 %v286, %v581
    %583 = vmatmul.f32.gmra.mxu0 %v62
    %v584 = vpop.f32.mrf.mxu0
    %v585 = vadd.f32 %v291, %v584
    %586 = vmatmul.f32.gmra.mxu0 %v65
    %v587 = vpop.f32.mrf.mxu0
    %v588 = vadd.f32 %v296, %v587
    %589 = vmatmul.f32.gmra.mxu0 %v68
    %v590 = vpop.f32.mrf.mxu0
    %v591 = vadd.f32 %v301, %v590
    %592 = vmatmul.f32.gmra.mxu0 %v71
    %v593 = vpop.f32.mrf.mxu0
    %v594 = vadd.f32 %v306, %v593
    %595 = vmatmul.f32.gmra.mxu0 %v74
    %v596 = vpop.f32.mrf.mxu0
    %v597 = vadd.f32 %v311, %v596
    %598 = vmatmul.f32.gmra.mxu0 %v77
    %v599 = vpop.f32.mrf.mxu0
    %v600 = vadd.f32 %v316, %v599
    %601 = vmatmul.f32.gmra.mxu0 %v80
    %v602 = vpop.f32.mrf.mxu0
    %v603 = vadd.f32 %v321, %v602
    %604 = vmatmul.f32.gmra.mxu0 %v83
    %v605 = vpop.f32.mrf.mxu0
    %v606 = vadd.f32 %v326, %v605
    %607 = vmatmul.f32.gmra.mxu0 %v86
    %v608 = vpop.f32.mrf.mxu0
    %v609 = vadd.f32 %v331, %v608
    %610 = vmatmul.f32.gmra.mxu0 %v89
    %v611 = vpop.f32.mrf.mxu0
    %v612 = vadd.f32 %v336, %v611
    %613 = vmatmul.f32.gmra.mxu0 %v92
    %v614 = vpop.f32.mrf.mxu0
    %v615 = vadd.f32 %v341, %v614
    %616 = vmatmul.f32.gmra.mxu0 %v95
    %v617 = vpop.f32.mrf.mxu0
    %v618 = vadd.f32 %v346, %v617
    %619 = vmatmul.f32.gmra.mxu0 %v98
    %v620 = vpop.f32.mrf.mxu0
    %v621 = vadd.f32 %v351, %v620
    %622 = vmatmul.f32.gmra.mxu0 %v101
    %v623 = vpop.f32.mrf.mxu0
    %v624 = vadd.f32 %v356, %v623
    %625 = vmatmul.f32.gmra.mxu0 %v104
    %v626 = vpop.f32.mrf.mxu0
    %v627 = vadd.f32 %v361, %v626
    %628 = vmatmul.f32.gmra.mxu0 %v107
    %v629 = vpop.f32.mrf.mxu0
    %v630 = vadd.f32 %v366, %v629
    %631 = vmatmul.f32.gmra.mxu0 %v110
    %v632 = vpop.f32.mrf.mxu0
    %v633 = vadd.f32 %v371, %v632
    %634 = vmatmul.f32.gmra.mxu0 %v113
    %v635 = vpop.f32.mrf.mxu0
    %v636 = vadd.f32 %v376, %v635
    %637 = vmatmul.f32.gmra.mxu0 %v116
    %v638 = vpop.f32.mrf.mxu0
    %v639 = vadd.f32 %v381, %v638
    %640 = vmatmul.f32.gmra.mxu0 %v119
    %v641 = vpop.f32.mrf.mxu0
    %v642 = vadd.f32 %v386, %v641
    %643 = vmatmul.f32.gmra.mxu0 %v122
    %v644 = vpop.f32.mrf.mxu0
    %v645 = vadd.f32 %v391, %v644
    %646 = vmatmul.f32.gmra.mxu0 %v125
    %v647 = vpop.f32.mrf.mxu0
    %v648 = vadd.f32 %v396, %v647
    %649 = vmatmul.f32.gmra.mxu0 %v128
    %v650 = vpop.f32.mrf.mxu0
    %v651 = vadd.f32 %v401, %v650
    %652 = vmatmul.f32.gmra.mxu0 %v131
    %v653 = vpop.f32.mrf.mxu0
    %v654 = vadd.f32 %v406, %v653
    %655 = vmatmul.f32.gmra.mxu0 %v134
    %v656 = vpop.f32.mrf.mxu0
    %v657 = vadd.f32 %v411, %v656
    %658 = vmatmul.f32.gmra.mxu0 %v137
    %v659 = vpop.f32.mrf.mxu0
    %v660 = vadd.f32 %v416, %v659
    %661 = vmatmul.f32.gmra.mxu0 %v140
    %v662 = vpop.f32.mrf.mxu0
    %v663 = vadd.f32 %v421, %v662
    %664 = vmatmul.f32.gmra.mxu0 %v143
    %v665 = vpop.f32.mrf.mxu0
    %v666 = vadd.f32 %v426, %v665
    %667 = vmatmul.f32.gmra.mxu0 %v146
    %v668 = vpop.f32.mrf.mxu0
    %v669 = vadd.f32 %v431, %v668
    %670 = vmatmul.f32.gmra.mxu0 %v149
    %v671 = vpop.f32.mrf.mxu0
    %v672 = vadd.f32 %v436, %v671
    %673 = vmatmul.f32.gmra.mxu0 %v152
    %v674 = vpop.f32.mrf.mxu0
    %v675 = vadd.f32 %v441, %v674
    %676 = vdwg.mxu0
    %677 = vmatpush.msra.mxu0 %v217
    %678 = vmatpush.msra.mxu0 %v215
    %679 = vmatpush.msra.mxu0 %v213
    %680 = vmatpush.msra.mxu0 %v211
    %681 = vmatpush.msra.mxu0 %v209
    %682 = vmatpush.msra.mxu0 %v207
    %683 = vmatpush.msra.mxu0 %v205
    %684 = vmatpush.msra.mxu0 %v203
    %685 = vmatpush.msra.mxu0 %v201
    %686 = vmatpush.msra.mxu0 %v199
    %687 = vmatpush.msra.mxu0 %v197
    %688 = vmatpush.msra.mxu0 %v195
    %689 = vmatpush.msra.mxu0 %v193
    %690 = vmatpush.msra.mxu0 %v191
    %691 = vmatpush.msra.mxu0 %v189
    %692 = vmatpush.msra.mxu0 %v187
    %693 = vmatmul.f32.gmra.mxu0 %v48
    %v694 = vpop.f32.mrf.mxu0
    %v695 = vadd.f32 %v570, %v694
    %696 = vmatmul.f32.gmra.mxu0 %v51
    %v697 = vpop.f32.mrf.mxu0
    %v698 = vadd.f32 %v573, %v697
    %699 = vmatmul.f32.gmra.mxu0 %v54
    %v700 = vpop.f32.mrf.mxu0
    %v701 = vadd.f32 %v576, %v700
    %702 = vmatmul.f32.gmra.mxu0 %v57
    %v703 = vpop.f32.mrf.mxu0
    %v704 = vadd.f32 %v579, %v703
    %705 = vmatmul.f32.gmra.mxu0 %v60
    %v706 = vpop.f32.mrf.mxu0
    %v707 = vadd.f32 %v582, %v706
    %708 = vmatmul.f32.gmra.mxu0 %v63
    %v709 = vpop.f32.mrf.mxu0
    %v710 = vadd.f32 %v585, %v709
    %711 = vmatmul.f32.gmra.mxu0 %v66
    %v712 = vpop.f32.mrf.mxu0
    %v713 = vadd.f32 %v588, %v712
    %714 = vmatmul.f32.gmra.mxu0 %v69
    %v715 = vpop.f32.mrf.mxu0
    %v716 = vadd.f32 %v591, %v715
    %717 = vmatmul.f32.gmra.mxu0 %v72
    %v718 = vpop.f32.mrf.mxu0
    %v719 = vadd.f32 %v594, %v718
    %720 = vmatmul.f32.gmra.mxu0 %v75
    %v721 = vpop.f32.mrf.mxu0
    %v722 = vadd.f32 %v597, %v721
    %723 = vmatmul.f32.gmra.mxu0 %v78
    %v724 = vpop.f32.mrf.mxu0
    %v725 = vadd.f32 %v600, %v724
    %726 = vmatmul.f32.gmra.mxu0 %v81
    %v727 = vpop.f32.mrf.mxu0
    %v728 = vadd.f32 %v603, %v727
    %729 = vmatmul.f32.gmra.mxu0 %v84
    %v730 = vpop.f32.mrf.mxu0
    %v731 = vadd.f32 %v606, %v730
    %732 = vmatmul.f32.gmra.mxu0 %v87
    %v733 = vpop.f32.mrf.mxu0
    %v734 = vadd.f32 %v609, %v733
    %735 = vmatmul.f32.gmra.mxu0 %v90
    %v736 = vpop.f32.mrf.mxu0
    %v737 = vadd.f32 %v612, %v736
    %738 = vmatmul.f32.gmra.mxu0 %v93
    %v739 = vpop.f32.mrf.mxu0
    %v740 = vadd.f32 %v615, %v739
    %741 = vmatmul.f32.gmra.mxu0 %v96
    %v742 = vpop.f32.mrf.mxu0
    %v743 = vadd.f32 %v618, %v742
    %744 = vmatmul.f32.gmra.mxu0 %v99
    %v745 = vpop.f32.mrf.mxu0
    %v746 = vadd.f32 %v621, %v745
    %747 = vmatmul.f32.gmra.mxu0 %v102
    %v748 = vpop.f32.mrf.mxu0
    %v749 = vadd.f32 %v624, %v748
    %750 = vmatmul.f32.gmra.mxu0 %v105
    %v751 = vpop.f32.mrf.mxu0
    %v752 = vadd.f32 %v627, %v751
    %753 = vmatmul.f32.gmra.mxu0 %v108
    %v754 = vpop.f32.mrf.mxu0
    %v755 = vadd.f32 %v630, %v754
    %756 = vmatmul.f32.gmra.mxu0 %v111
    %v757 = vpop.f32.mrf.mxu0
    %v758 = vadd.f32 %v633, %v757
    %759 = vmatmul.f32.gmra.mxu0 %v114
    %v760 = vpop.f32.mrf.mxu0
    %v761 = vadd.f32 %v636, %v760
    %762 = vmatmul.f32.gmra.mxu0 %v117
    %v763 = vpop.f32.mrf.mxu0
    %v764 = vadd.f32 %v639, %v763
    %765 = vmatmul.f32.gmra.mxu0 %v120
    %v766 = vpop.f32.mrf.mxu0
    %v767 = vadd.f32 %v642, %v766
    %768 = vmatmul.f32.gmra.mxu0 %v123
    %v769 = vpop.f32.mrf.mxu0
    %v770 = vadd.f32 %v645, %v769
    %771 = vmatmul.f32.gmra.mxu0 %v126
    %v772 = vpop.f32.mrf.mxu0
    %v773 = vadd.f32 %v648, %v772
    %774 = vmatmul.f32.gmra.mxu0 %v129
    %v775 = vpop.f32.mrf.mxu0
    %v776 = vadd.f32 %v651, %v775
    %777 = vmatmul.f32.gmra.mxu0 %v132
    %v778 = vpop.f32.mrf.mxu0
    %v779 = vadd.f32 %v654, %v778
    %780 = vmatmul.f32.gmra.mxu0 %v135
    %v781 = vpop.f32.mrf.mxu0
    %v782 = vadd.f32 %v657, %v781
    %783 = vmatmul.f32.gmra.mxu0 %v138
    %v784 = vpop.f32.mrf.mxu0
    %v785 = vadd.f32 %v660, %v784
    %786 = vmatmul.f32.gmra.mxu0 %v141
    %v787 = vpop.f32.mrf.mxu0
    %v788 = vadd.f32 %v663, %v787
    %789 = vmatmul.f32.gmra.mxu0 %v144
    %v790 = vpop.f32.mrf.mxu0
    %v791 = vadd.f32 %v666, %v790
    %792 = vmatmul.f32.gmra.mxu0 %v147
    %v793 = vpop.f32.mrf.mxu0
    %v794 = vadd.f32 %v669, %v793
    %795 = vmatmul.f32.gmra.mxu0 %v150
    %v796 = vpop.f32.mrf.mxu0
    %v797 = vadd.f32 %v672, %v796
    %798 = vmatmul.f32.gmra.mxu0 %v153
    %v799 = vpop.f32.mrf.mxu0
    %v800 = vadd.f32 %v675, %v799
    %801 = vdwg.mxu0
    %802 = vmatpush.msra.mxu0 0.0
    %803 = vmatpush.msra.mxu0 0.0
    %804 = vmatpush.msra.mxu0 0.0
    %805 = vmatpush.msra.mxu0 0.0
    %806 = vmatpush.msra.mxu0 0.0
    %807 = vmatpush.msra.mxu0 0.0
    %808 = vmatpush.msra.mxu0 0.0
    %809 = vmatpush.msra.mxu0 0.0
    %810 = vmatpush.msra.mxu0 0.0
    %811 = vmatpush.msra.mxu0 0.0
    %812 = vmatpush.msra.mxu0 0.0
    %813 = vmatpush.msra.mxu0 0.0
    %814 = vmatpush.msra.mxu0 %v225
    %815 = vmatpush.msra.mxu0 %v223
    %816 = vmatpush.msra.mxu0 %v221
    %817 = vmatpush.msra.mxu0 %v219
    %818 = vmatmul.f32.gmra.mxu0 %v445
    %v819 = vpop.f32.mrf.mxu0
    %v820 = vadd.f32 %v695, %v819
    %821 = vmatmul.f32.gmra.mxu0 %v448
    %v822 = vpop.f32.mrf.mxu0
    %v823 = vadd.f32 %v698, %v822
    %824 = vmatmul.f32.gmra.mxu0 %v451
    %v825 = vpop.f32.mrf.mxu0
    %v826 = vadd.f32 %v701, %v825
    %827 = vmatmul.f32.gmra.mxu0 %v454
    %v828 = vpop.f32.mrf.mxu0
    %v829 = vadd.f32 %v704, %v828
    %830 = vmatmul.f32.gmra.mxu0 %v457
    %v831 = vpop.f32.mrf.mxu0
    %v832 = vadd.f32 %v707, %v831
    %833 = vmatmul.f32.gmra.mxu0 %v460
    %v834 = vpop.f32.mrf.mxu0
    %v835 = vadd.f32 %v710, %v834
    %836 = vmatmul.f32.gmra.mxu0 %v463
    %v837 = vpop.f32.mrf.mxu0
    %v838 = vadd.f32 %v713, %v837
    %839 = vmatmul.f32.gmra.mxu0 %v466
    %v840 = vpop.f32.mrf.mxu0
    %v841 = vadd.f32 %v716, %v840
    %842 = vmatmul.f32.gmra.mxu0 %v469
    %v843 = vpop.f32.mrf.mxu0
    %v844 = vadd.f32 %v719, %v843
    %845 = vmatmul.f32.gmra.mxu0 %v472
    %v846 = vpop.f32.mrf.mxu0
    %v847 = vadd.f32 %v722, %v846
    %848 = vmatmul.f32.gmra.mxu0 %v475
    %v849 = vpop.f32.mrf.mxu0
    %v850 = vadd.f32 %v725, %v849
    %851 = vmatmul.f32.gmra.mxu0 %v478
    %v852 = vpop.f32.mrf.mxu0
    %v853 = vadd.f32 %v728, %v852
    %854 = vmatmul.f32.gmra.mxu0 %v481
    %v855 = vpop.f32.mrf.mxu0
    %v856 = vadd.f32 %v731, %v855
    %857 = vmatmul.f32.gmra.mxu0 %v484
    %v858 = vpop.f32.mrf.mxu0
    %v859 = vadd.f32 %v734, %v858
    %860 = vmatmul.f32.gmra.mxu0 %v487
    %v861 = vpop.f32.mrf.mxu0
    %v862 = vadd.f32 %v737, %v861
    %863 = vmatmul.f32.gmra.mxu0 %v490
    %v864 = vpop.f32.mrf.mxu0
    %v865 = vadd.f32 %v740, %v864
    %866 = vmatmul.f32.gmra.mxu0 %v493
    %v867 = vpop.f32.mrf.mxu0
    %v868 = vadd.f32 %v743, %v867
    %869 = vmatmul.f32.gmra.mxu0 %v496
    %v870 = vpop.f32.mrf.mxu0
    %v871 = vadd.f32 %v746, %v870
    %872 = vmatmul.f32.gmra.mxu0 %v499
    %v873 = vpop.f32.mrf.mxu0
    %v874 = vadd.f32 %v749, %v873
    %875 = vmatmul.f32.gmra.mxu0 %v502
    %v876 = vpop.f32.mrf.mxu0
    %v877 = vadd.f32 %v752, %v876
    %878 = vmatmul.f32.gmra.mxu0 %v505
    %v879 = vpop.f32.mrf.mxu0
    %v880 = vadd.f32 %v755, %v879
    %881 = vmatmul.f32.gmra.mxu0 %v508
    %v882 = vpop.f32.mrf.mxu0
    %v883 = vadd.f32 %v758, %v882
    %884 = vmatmul.f32.gmra.mxu0 %v511
    %v885 = vpop.f32.mrf.mxu0
    %v886 = vadd.f32 %v761, %v885
    %887 = vmatmul.f32.gmra.mxu0 %v514
    %v888 = vpop.f32.mrf.mxu0
    %v889 = vadd.f32 %v764, %v888
    %890 = vmatmul.f32.gmra.mxu0 %v517
    %v891 = vpop.f32.mrf.mxu0
    %v892 = vadd.f32 %v767, %v891
    %893 = vmatmul.f32.gmra.mxu0 %v520
    %v894 = vpop.f32.mrf.mxu0
    %v895 = vadd.f32 %v770, %v894
    %896 = vmatmul.f32.gmra.mxu0 %v523
    %v897 = vpop.f32.mrf.mxu0
    %v898 = vadd.f32 %v773, %v897
    %899 = vmatmul.f32.gmra.mxu0 %v526
    %v900 = vpop.f32.mrf.mxu0
    %v901 = vadd.f32 %v776, %v900
    %902 = vmatmul.f32.gmra.mxu0 %v529
    %v903 = vpop.f32.mrf.mxu0
    %v904 = vadd.f32 %v779, %v903
    %905 = vmatmul.f32.gmra.mxu0 %v532
    %v906 = vpop.f32.mrf.mxu0
    %v907 = vadd.f32 %v782, %v906
    %908 = vmatmul.f32.gmra.mxu0 %v535
    %v909 = vpop.f32.mrf.mxu0
    %v910 = vadd.f32 %v785, %v909
    %911 = vmatmul.f32.gmra.mxu0 %v538
    %v912 = vpop.f32.mrf.mxu0
    %v913 = vadd.f32 %v788, %v912
    %914 = vmatmul.f32.gmra.mxu0 %v541
    %v915 = vpop.f32.mrf.mxu0
    %v916 = vadd.f32 %v791, %v915
    %917 = vmatmul.f32.gmra.mxu0 %v544
    %v918 = vpop.f32.mrf.mxu0
    %v919 = vadd.f32 %v794, %v918
    %920 = vmatmul.f32.gmra.mxu0 %v547
    %v921 = vpop.f32.mrf.mxu0
    %v922 = vadd.f32 %v797, %v921
    %923 = vmatmul.f32.gmra.mxu0 %v550
    %v924 = vpop.f32.mrf.mxu0
    %v925 = vadd.f32 %v800, %v924
    %926 = vdwg.mxu0
    %927 = vmatpush.msra.mxu0 %v186
    %928 = vmatpush.msra.mxu0 %v184
    %929 = vmatpush.msra.mxu0 %v182
    %930 = vmatpush.msra.mxu0 %v180
    %931 = vmatpush.msra.mxu0 %v178
    %932 = vmatpush.msra.mxu0 %v176
    %933 = vmatpush.msra.mxu0 %v174
    %934 = vmatpush.msra.mxu0 %v172
    %935 = vmatpush.msra.mxu0 %v170
    %936 = vmatpush.msra.mxu0 %v168
    %937 = vmatpush.msra.mxu0 %v166
    %938 = vmatpush.msra.mxu0 %v164
    %939 = vmatpush.msra.mxu0 %v162
    %940 = vmatpush.msra.mxu0 %v160
    %941 = vmatpush.msra.mxu0 %v158
    %942 = vmatpush.msra.mxu0 %v156
    %943 = vmatmul.f32.gmra.mxu0 %v47
    %v944 = vpop.f32.mrf.mxu0
    %v945 = vadd.f32 %v266, %v944
    %946 = vmatmul.f32.gmra.mxu0 %v50
    %v947 = vpop.f32.mrf.mxu0
    %v948 = vadd.f32 %v271, %v947
    %949 = vmatmul.f32.gmra.mxu0 %v53
    %v950 = vpop.f32.mrf.mxu0
    %v951 = vadd.f32 %v276, %v950
    %952 = vmatmul.f32.gmra.mxu0 %v56
    %v953 = vpop.f32.mrf.mxu0
    %v954 = vadd.f32 %v281, %v953
    %955 = vmatmul.f32.gmra.mxu0 %v59
    %v956 = vpop.f32.mrf.mxu0
    %v957 = vadd.f32 %v286, %v956
    %958 = vmatmul.f32.gmra.mxu0 %v62
    %v959 = vpop.f32.mrf.mxu0
    %v960 = vadd.f32 %v291, %v959
    %961 = vmatmul.f32.gmra.mxu0 %v65
    %v962 = vpop.f32.mrf.mxu0
    %v963 = vadd.f32 %v296, %v962
    %964 = vmatmul.f32.gmra.mxu0 %v68
    %v965 = vpop.f32.mrf.mxu0
    %v966 = vadd.f32 %v301, %v965
    %967 = vmatmul.f32.gmra.mxu0 %v71
    %v968 = vpop.f32.mrf.mxu0
    %v969 = vadd.f32 %v306, %v968
    %970 = vmatmul.f32.gmra.mxu0 %v74
    %v971 = vpop.f32.mrf.mxu0
    %v972 = vadd.f32 %v311, %v971
    %973 = vmatmul.f32.gmra.mxu0 %v77
    %v974 = vpop.f32.mrf.mxu0
    %v975 = vadd.f32 %v316, %v974
    %976 = vmatmul.f32.gmra.mxu0 %v80
    %v977 = vpop.f32.mrf.mxu0
    %v978 = vadd.f32 %v321, %v977
    %979 = vmatmul.f32.gmra.mxu0 %v83
    %v980 = vpop.f32.mrf.mxu0
    %v981 = vadd.f32 %v326, %v980
    %982 = vmatmul.f32.gmra.mxu0 %v86
    %v983 = vpop.f32.mrf.mxu0
    %v984 = vadd.f32 %v331, %v983
    %985 = vmatmul.f32.gmra.mxu0 %v89
    %v986 = vpop.f32.mrf.mxu0
    %v987 = vadd.f32 %v336, %v986
    %988 = vmatmul.f32.gmra.mxu0 %v92
    %v989 = vpop.f32.mrf.mxu0
    %v990 = vadd.f32 %v341, %v989
    %991 = vmatmul.f32.gmra.mxu0 %v95
    %v992 = vpop.f32.mrf.mxu0
    %v993 = vadd.f32 %v346, %v992
    %994 = vmatmul.f32.gmra.mxu0 %v98
    %v995 = vpop.f32.mrf.mxu0
    %v996 = vadd.f32 %v351, %v995
    %997 = vmatmul.f32.gmra.mxu0 %v101
    %v998 = vpop.f32.mrf.mxu0
    %v999 = vadd.f32 %v356, %v998
    %1000 = vmatmul.f32.gmra.mxu0 %v104
    %v1001 = vpop.f32.mrf.mxu0
    %v1002 = vadd.f32 %v361, %v1001
    %1003 = vmatmul.f32.gmra.mxu0 %v107
    %v1004 = vpop.f32.mrf.mxu0
    %v1005 = vadd.f32 %v366, %v1004
    %1006 = vmatmul.f32.gmra.mxu0 %v110
    %v1007 = vpop.f32.mrf.mxu0
    %v1008 = vadd.f32 %v371, %v1007
    %1009 = vmatmul.f32.gmra.mxu0 %v113
    %v1010 = vpop.f32.mrf.mxu0
    %v1011 = vadd.f32 %v376, %v1010
    %1012 = vmatmul.f32.gmra.mxu0 %v116
    %v1013 = vpop.f32.mrf.mxu0
    %v1014 = vadd.f32 %v381, %v1013
    %1015 = vmatmul.f32.gmra.mxu0 %v119
    %v1016 = vpop.f32.mrf.mxu0
    %v1017 = vadd.f32 %v386, %v1016
    %1018 = vmatmul.f32.gmra.mxu0 %v122
    %v1019 = vpop.f32.mrf.mxu0
    %v1020 = vadd.f32 %v391, %v1019
    %1021 = vmatmul.f32.gmra.mxu0 %v125
    %v1022 = vpop.f32.mrf.mxu0
    %v1023 = vadd.f32 %v396, %v1022
    %1024 = vmatmul.f32.gmra.mxu0 %v128
    %v1025 = vpop.f32.mrf.mxu0
    %v1026 = vadd.f32 %v401, %v1025
    %1027 = vmatmul.f32.gmra.mxu0 %v131
    %v1028 = vpop.f32.mrf.mxu0
    %v1029 = vadd.f32 %v406, %v1028
    %1030 = vmatmul.f32.gmra.mxu0 %v134
    %v1031 = vpop.f32.mrf.mxu0
    %v1032 = vadd.f32 %v411, %v1031
    %1033 = vmatmul.f32.gmra.mxu0 %v137
    %v1034 = vpop.f32.mrf.mxu0
    %v1035 = vadd.f32 %v416, %v1034
    %1036 = vmatmul.f32.gmra.mxu0 %v140
    %v1037 = vpop.f32.mrf.mxu0
    %v1038 = vadd.f32 %v421, %v1037
    %1039 = vmatmul.f32.gmra.mxu0 %v143
    %v1040 = vpop.f32.mrf.mxu0
    %v1041 = vadd.f32 %v426, %v1040
    %1042 = vmatmul.f32.gmra.mxu0 %v146
    %v1043 = vpop.f32.mrf.mxu0
    %v1044 = vadd.f32 %v431, %v1043
    %1045 = vmatmul.f32.gmra.mxu0 %v149
    %v1046 = vpop.f32.mrf.mxu0
    %v1047 = vadd.f32 %v436, %v1046
    %1048 = vmatmul.f32.gmra.mxu0 %v152
    %v1049 = vpop.f32.mrf.mxu0
    %v1050 = vadd.f32 %v441, %v1049
    %1051 = vdwg.mxu0
    %1052 = vmatpush.msra.mxu0 %v218
    %1053 = vmatpush.msra.mxu0 %v216
    %1054 = vmatpush.msra.mxu0 %v214
    %1055 = vmatpush.msra.mxu0 %v212
    %1056 = vmatpush.msra.mxu0 %v210
    %1057 = vmatpush.msra.mxu0 %v208
    %1058 = vmatpush.msra.mxu0 %v206
    %1059 = vmatpush.msra.mxu0 %v204
    %1060 = vmatpush.msra.mxu0 %v202
    %1061 = vmatpush.msra.mxu0 %v200
    %1062 = vmatpush.msra.mxu0 %v198
    %1063 = vmatpush.msra.mxu0 %v196
    %1064 = vmatpush.msra.mxu0 %v194
    %1065 = vmatpush.msra.mxu0 %v192
    %1066 = vmatpush.msra.mxu0 %v190
    %1067 = vmatpush.msra.mxu0 %v188
    %1068 = vmatmul.f32.gmra.mxu0 %v48
    %v1069 = vpop.f32.mrf.mxu0
    %v1070 = vadd.f32 %v945, %v1069
    %1071 = vmatmul.f32.gmra.mxu0 %v51
    %v1072 = vpop.f32.mrf.mxu0
    %v1073 = vadd.f32 %v948, %v1072
    %1074 = vmatmul.f32.gmra.mxu0 %v54
    %v1075 = vpop.f32.mrf.mxu0
    %v1076 = vadd.f32 %v951, %v1075
    %1077 = vmatmul.f32.gmra.mxu0 %v57
    %v1078 = vpop.f32.mrf.mxu0
    %v1079 = vadd.f32 %v954, %v1078
    %1080 = vmatmul.f32.gmra.mxu0 %v60
    %v1081 = vpop.f32.mrf.mxu0
    %v1082 = vadd.f32 %v957, %v1081
    %1083 = vmatmul.f32.gmra.mxu0 %v63
    %v1084 = vpop.f32.mrf.mxu0
    %v1085 = vadd.f32 %v960, %v1084
    %1086 = vmatmul.f32.gmra.mxu0 %v66
    %v1087 = vpop.f32.mrf.mxu0
    %v1088 = vadd.f32 %v963, %v1087
    %1089 = vmatmul.f32.gmra.mxu0 %v69
    %v1090 = vpop.f32.mrf.mxu0
    %v1091 = vadd.f32 %v966, %v1090
    %1092 = vmatmul.f32.gmra.mxu0 %v72
    %v1093 = vpop.f32.mrf.mxu0
    %v1094 = vadd.f32 %v969, %v1093
    %1095 = vmatmul.f32.gmra.mxu0 %v75
    %v1096 = vpop.f32.mrf.mxu0
    %v1097 = vadd.f32 %v972, %v1096
    %1098 = vmatmul.f32.gmra.mxu0 %v78
    %v1099 = vpop.f32.mrf.mxu0
    %v1100 = vadd.f32 %v975, %v1099
    %1101 = vmatmul.f32.gmra.mxu0 %v81
    %v1102 = vpop.f32.mrf.mxu0
    %v1103 = vadd.f32 %v978, %v1102
    %1104 = vmatmul.f32.gmra.mxu0 %v84
    %v1105 = vpop.f32.mrf.mxu0
    %v1106 = vadd.f32 %v981, %v1105
    %1107 = vmatmul.f32.gmra.mxu0 %v87
    %v1108 = vpop.f32.mrf.mxu0
    %v1109 = vadd.f32 %v984, %v1108
    %1110 = vmatmul.f32.gmra.mxu0 %v90
    %v1111 = vpop.f32.mrf.mxu0
    %v1112 = vadd.f32 %v987, %v1111
    %1113 = vmatmul.f32.gmra.mxu0 %v93
    %v1114 = vpop.f32.mrf.mxu0
    %v1115 = vadd.f32 %v990, %v1114
    %1116 = vmatmul.f32.gmra.mxu0 %v96
    %v1117 = vpop.f32.mrf.mxu0
    %v1118 = vadd.f32 %v993, %v1117
    %1119 = vmatmul.f32.gmra.mxu0 %v99
    %v1120 = vpop.f32.mrf.mxu0
    %v1121 = vadd.f32 %v996, %v1120
    %1122 = vmatmul.f32.gmra.mxu0 %v102
    %v1123 = vpop.f32.mrf.mxu0
    %v1124 = vadd.f32 %v999, %v1123
    %1125 = vmatmul.f32.gmra.mxu0 %v105
    %v1126 = vpop.f32.mrf.mxu0
    %v1127 = vadd.f32 %v1002, %v1126
    %1128 = vmatmul.f32.gmra.mxu0 %v108
    %v1129 = vpop.f32.mrf.mxu0
    %v1130 = vadd.f32 %v1005, %v1129
    %1131 = vmatmul.f32.gmra.mxu0 %v111
    %v1132 = vpop.f32.mrf.mxu0
    %v1133 = vadd.f32 %v1008, %v1132
    %1134 = vmatmul.f32.gmra.mxu0 %v114
    %v1135 = vpop.f32.mrf.mxu0
    %v1136 = vadd.f32 %v1011, %v1135
    %1137 = vmatmul.f32.gmra.mxu0 %v117
    %v1138 = vpop.f32.mrf.mxu0
    %v1139 = vadd.f32 %v1014, %v1138
    %1140 = vmatmul.f32.gmra.mxu0 %v120
    %v1141 = vpop.f32.mrf.mxu0
    %v1142 = vadd.f32 %v1017, %v1141
    %1143 = vmatmul.f32.gmra.mxu0 %v123
    %v1144 = vpop.f32.mrf.mxu0
    %v1145 = vadd.f32 %v1020, %v1144
    %1146 = vmatmul.f32.gmra.mxu0 %v126
    %v1147 = vpop.f32.mrf.mxu0
    %v1148 = vadd.f32 %v1023, %v1147
    %1149 = vmatmul.f32.gmra.mxu0 %v129
    %v1150 = vpop.f32.mrf.mxu0
    %v1151 = vadd.f32 %v1026, %v1150
    %1152 = vmatmul.f32.gmra.mxu0 %v132
    %v1153 = vpop.f32.mrf.mxu0
    %v1154 = vadd.f32 %v1029, %v1153
    %1155 = vmatmul.f32.gmra.mxu0 %v135
    %v1156 = vpop.f32.mrf.mxu0
    %v1157 = vadd.f32 %v1032, %v1156
    %1158 = vmatmul.f32.gmra.mxu0 %v138
    %v1159 = vpop.f32.mrf.mxu0
    %v1160 = vadd.f32 %v1035, %v1159
    %1161 = vmatmul.f32.gmra.mxu0 %v141
    %v1162 = vpop.f32.mrf.mxu0
    %v1163 = vadd.f32 %v1038, %v1162
    %1164 = vmatmul.f32.gmra.mxu0 %v144
    %v1165 = vpop.f32.mrf.mxu0
    %v1166 = vadd.f32 %v1041, %v1165
    %1167 = vmatmul.f32.gmra.mxu0 %v147
    %v1168 = vpop.f32.mrf.mxu0
    %v1169 = vadd.f32 %v1044, %v1168
    %1170 = vmatmul.f32.gmra.mxu0 %v150
    %v1171 = vpop.f32.mrf.mxu0
    %v1172 = vadd.f32 %v1047, %v1171
    %1173 = vmatmul.f32.gmra.mxu0 %v153
    %v1174 = vpop.f32.mrf.mxu0
    %v1175 = vadd.f32 %v1050, %v1174
    %1176 = vdwg.mxu0
    %1177 = vmatpush.msra.mxu0 0.0
    %1178 = vmatpush.msra.mxu0 0.0
    %1179 = vmatpush.msra.mxu0 0.0
    %1180 = vmatpush.msra.mxu0 0.0
    %1181 = vmatpush.msra.mxu0 0.0
    %1182 = vmatpush.msra.mxu0 0.0
    %1183 = vmatpush.msra.mxu0 0.0
    %1184 = vmatpush.msra.mxu0 0.0
    %1185 = vmatpush.msra.mxu0 0.0
    %1186 = vmatpush.msra.mxu0 0.0
    %1187 = vmatpush.msra.mxu0 0.0
    %1188 = vmatpush.msra.mxu0 0.0
    %1189 = vmatpush.msra.mxu0 %v226
    %1190 = vmatpush.msra.mxu0 %v224
    %1191 = vmatpush.msra.mxu0 %v222
    %1192 = vmatpush.msra.mxu0 %v220
    %1193 = vmatmul.f32.gmra.mxu0 %v445
    %v1194 = vpop.f32.mrf.mxu0
    %v1195 = vadd.f32 %v1070, %v1194
    %1196 = vmatmul.f32.gmra.mxu0 %v448
    %v1197 = vpop.f32.mrf.mxu0
    %v1198 = vadd.f32 %v1073, %v1197
    %1199 = vmatmul.f32.gmra.mxu0 %v451
    %v1200 = vpop.f32.mrf.mxu0
    %v1201 = vadd.f32 %v1076, %v1200
    %1202 = vmatmul.f32.gmra.mxu0 %v454
    %v1203 = vpop.f32.mrf.mxu0
    %v1204 = vadd.f32 %v1079, %v1203
    %1205 = vmatmul.f32.gmra.mxu0 %v457
    %v1206 = vpop.f32.mrf.mxu0
    %v1207 = vadd.f32 %v1082, %v1206
    %1208 = vmatmul.f32.gmra.mxu0 %v460
    %v1209 = vpop.f32.mrf.mxu0
    %v1210 = vadd.f32 %v1085, %v1209
    %1211 = vmatmul.f32.gmra.mxu0 %v463
    %v1212 = vpop.f32.mrf.mxu0
    %v1213 = vadd.f32 %v1088, %v1212
    %1214 = vmatmul.f32.gmra.mxu0 %v466
    %v1215 = vpop.f32.mrf.mxu0
    %v1216 = vadd.f32 %v1091, %v1215
    %1217 = vmatmul.f32.gmra.mxu0 %v469
    %v1218 = vpop.f32.mrf.mxu0
    %v1219 = vadd.f32 %v1094, %v1218
    %1220 = vmatmul.f32.gmra.mxu0 %v472
    %v1221 = vpop.f32.mrf.mxu0
    %v1222 = vadd.f32 %v1097, %v1221
    %1223 = vmatmul.f32.gmra.mxu0 %v475
    %v1224 = vpop.f32.mrf.mxu0
    %v1225 = vadd.f32 %v1100, %v1224
    %1226 = vmatmul.f32.gmra.mxu0 %v478
    %v1227 = vpop.f32.mrf.mxu0
    %v1228 = vadd.f32 %v1103, %v1227
    %1229 = vmatmul.f32.gmra.mxu0 %v481
    %v1230 = vpop.f32.mrf.mxu0
    %v1231 = vadd.f32 %v1106, %v1230
    %1232 = vmatmul.f32.gmra.mxu0 %v484
    %v1233 = vpop.f32.mrf.mxu0
    %v1234 = vadd.f32 %v1109, %v1233
    %1235 = vmatmul.f32.gmra.mxu0 %v487
    %v1236 = vpop.f32.mrf.mxu0
    %v1237 = vadd.f32 %v1112, %v1236
    %1238 = vmatmul.f32.gmra.mxu0 %v490
    %v1239 = vpop.f32.mrf.mxu0
    %v1240 = vadd.f32 %v1115, %v1239
    %1241 = vmatmul.f32.gmra.mxu0 %v493
    %v1242 = vpop.f32.mrf.mxu0
    %v1243 = vadd.f32 %v1118, %v1242
    %1244 = vmatmul.f32.gmra.mxu0 %v496
    %v1245 = vpop.f32.mrf.mxu0
    %v1246 = vadd.f32 %v1121, %v1245
    %1247 = vmatmul.f32.gmra.mxu0 %v499
    %v1248 = vpop.f32.mrf.mxu0
    %v1249 = vadd.f32 %v1124, %v1248
    %1250 = vmatmul.f32.gmra.mxu0 %v502
    %v1251 = vpop.f32.mrf.mxu0
    %v1252 = vadd.f32 %v1127, %v1251
    %1253 = vmatmul.f32.gmra.mxu0 %v505
    %v1254 = vpop.f32.mrf.mxu0
    %v1255 = vadd.f32 %v1130, %v1254
    %1256 = vmatmul.f32.gmra.mxu0 %v508
    %v1257 = vpop.f32.mrf.mxu0
    %v1258 = vadd.f32 %v1133, %v1257
    %1259 = vmatmul.f32.gmra.mxu0 %v511
    %v1260 = vpop.f32.mrf.mxu0
    %v1261 = vadd.f32 %v1136, %v1260
    %1262 = vmatmul.f32.gmra.mxu0 %v514
    %v1263 = vpop.f32.mrf.mxu0
    %v1264 = vadd.f32 %v1139, %v1263
    %1265 = vmatmul.f32.gmra.mxu0 %v517
    %v1266 = vpop.f32.mrf.mxu0
    %v1267 = vadd.f32 %v1142, %v1266
    %1268 = vmatmul.f32.gmra.mxu0 %v520
    %v1269 = vpop.f32.mrf.mxu0
    %v1270 = vadd.f32 %v1145, %v1269
    %1271 = vmatmul.f32.gmra.mxu0 %v523
    %v1272 = vpop.f32.mrf.mxu0
    %v1273 = vadd.f32 %v1148, %v1272
    %1274 = vmatmul.f32.gmra.mxu0 %v526
    %v1275 = vpop.f32.mrf.mxu0
    %v1276 = vadd.f32 %v1151, %v1275
    %1277 = vmatmul.f32.gmra.mxu0 %v529
    %v1278 = vpop.f32.mrf.mxu0
    %v1279 = vadd.f32 %v1154, %v1278
    %1280 = vmatmul.f32.gmra.mxu0 %v532
    %v1281 = vpop.f32.mrf.mxu0
    %v1282 = vadd.f32 %v1157, %v1281
    %1283 = vmatmul.f32.gmra.mxu0 %v535
    %v1284 = vpop.f32.mrf.mxu0
    %v1285 = vadd.f32 %v1160, %v1284
    %1286 = vmatmul.f32.gmra.mxu0 %v538
    %v1287 = vpop.f32.mrf.mxu0
    %v1288 = vadd.f32 %v1163, %v1287
    %1289 = vmatmul.f32.gmra.mxu0 %v541
    %v1290 = vpop.f32.mrf.mxu0
    %v1291 = vadd.f32 %v1166, %v1290
    %1292 = vmatmul.f32.gmra.mxu0 %v544
    %v1293 = vpop.f32.mrf.mxu0
    %v1294 = vadd.f32 %v1169, %v1293
    %1295 = vmatmul.f32.gmra.mxu0 %v547
    %v1296 = vpop.f32.mrf.mxu0
    %v1297 = vadd.f32 %v1172, %v1296
    %1298 = vmatmul.f32.gmra.mxu0 %v550
    %v1299 = vpop.f32.mrf.mxu0
    %v1300 = vadd.f32 %v1175, %v1299
    %1301 = vdwg.mxu0
    %v1302 = vmax.f32 %v820, 0.0
    %v1303 = vmax.f32 %v1195, 0.0
    %v1304 = vmax.f32 %v823, 0.0
    %v1305 = vmax.f32 %v1198, 0.0
    %v1306 = vmax.f32 %v826, 0.0
    %v1307 = vmax.f32 %v1201, 0.0
    %v1308 = vmax.f32 %v829, 0.0
    %v1309 = vmax.f32 %v1204, 0.0
    %v1310 = vmax.f32 %v832, 0.0
    %v1311 = vmax.f32 %v1207, 0.0
    %v1312 = vmax.f32 %v835, 0.0
    %v1313 = vmax.f32 %v1210, 0.0
    %v1314 = vmax.f32 %v838, 0.0
    %v1315 = vmax.f32 %v1213, 0.0
    %v1316 = vmax.f32 %v841, 0.0
    %v1317 = vmax.f32 %v1216, 0.0
    %v1318 = vmax.f32 %v844, 0.0
    %v1319 = vmax.f32 %v1219, 0.0
    %v1320 = vmax.f32 %v847, 0.0
    %v1321 = vmax.f32 %v1222, 0.0
    %v1322 = vmax.f32 %v850, 0.0
    %v1323 = vmax.f32 %v1225, 0.0
    %v1324 = vmax.f32 %v853, 0.0
    %v1325 = vmax.f32 %v1228, 0.0
    %v1326 = vmax.f32 %v856, 0.0
    %v1327 = vmax.f32 %v1231, 0.0
    %v1328 = vmax.f32 %v859, 0.0
    %v1329 = vmax.f32 %v1234, 0.0
    %v1330 = vmax.f32 %v862, 0.0
    %v1331 = vmax.f32 %v1237, 0.0
    %v1332 = vmax.f32 %v865, 0.0
    %v1333 = vmax.f32 %v1240, 0.0
    %v1334 = vmax.f32 %v868, 0.0
    %v1335 = vmax.f32 %v1243, 0.0
    %v1336 = vmax.f32 %v871, 0.0
    %v1337 = vmax.f32 %v1246, 0.0
    %v1338 = vmax.f32 %v874, 0.0
    %v1339 = vmax.f32 %v1249, 0.0
    %v1340 = vmax.f32 %v877, 0.0
    %v1341 = vmax.f32 %v1252, 0.0
    %v1342 = vmax.f32 %v880, 0.0
    %v1343 = vmax.f32 %v1255, 0.0
    %v1344 = vmax.f32 %v883, 0.0
    %v1345 = vmax.f32 %v1258, 0.0
    %v1346 = vmax.f32 %v886, 0.0
    %v1347 = vmax.f32 %v1261, 0.0
    %v1348 = vmax.f32 %v889, 0.0
    %v1349 = vmax.f32 %v1264, 0.0
    %v1350 = vmax.f32 %v892, 0.0
    %v1351 = vmax.f32 %v1267, 0.0
    %v1352 = vmax.f32 %v895, 0.0
    %v1353 = vmax.f32 %v1270, 0.0
    %v1354 = vmax.f32 %v898, 0.0
    %v1355 = vmax.f32 %v1273, 0.0
    %v1356 = vmax.f32 %v901, 0.0
    %v1357 = vmax.f32 %v1276, 0.0
    %v1358 = vmax.f32 %v904, 0.0
    %v1359 = vmax.f32 %v1279, 0.0
    %v1360 = vmax.f32 %v907, 0.0
    %v1361 = vmax.f32 %v1282, 0.0
    %v1362 = vmax.f32 %v910, 0.0
    %v1363 = vmax.f32 %v1285, 0.0
    %v1364 = vmax.f32 %v913, 0.0
    %v1365 = vmax.f32 %v1288, 0.0
    %v1366 = vmax.f32 %v916, 0.0
    %v1367 = vmax.f32 %v1291, 0.0
    %v1368 = vmax.f32 %v919, 0.0
    %v1369 = vmax.f32 %v1294, 0.0
    %v1370 = vmax.f32 %v922, 0.0
    %v1371 = vmax.f32 %v1297, 0.0
    %v1372 = vmax.f32 %v925, 0.0
    %v1373 = vmax.f32 %v1300, 0.0
    %1374 = vst [vmem:[#allocation7] sm:$0xff] %v1302
    %vm1375 = vcmask 556032
    %1376 = vst.msk [vmem:[#allocation7 + $0x8] sm:$0xff] %vm1375, %v1303
    %1377 = vst [vmem:[#allocation7 + $0x10] sm:$0xff] %v1304
    %1378 = vst.msk [vmem:[#allocation7 + $0x18] sm:$0xff] %vm1375, %v1305
    %1379 = vst [vmem:[#allocation7 + $0x20] sm:$0xff] %v1306
    %1380 = vst.msk [vmem:[#allocation7 + $0x28] sm:$0xff] %vm1375, %v1307
    %1381 = vst [vmem:[#allocation7 + $0x30] sm:$0xff] %v1308
    %1382 = vst.msk [vmem:[#allocation7 + $0x38] sm:$0xff] %vm1375, %v1309
    %1383 = vst [vmem:[#allocation7 + $0x40] sm:$0xff] %v1310
    %1384 = vst.msk [vmem:[#allocation7 + $0x48] sm:$0xff] %vm1375, %v1311
    %1385 = vst [vmem:[#allocation7 + $0x50] sm:$0xff] %v1312
    %1386 = vst.msk [vmem:[#allocation7 + $0x58] sm:$0xff] %vm1375, %v1313
    %1387 = vst [vmem:[#allocation7 + $0x60] sm:$0xff] %v1314
    %1388 = vst.msk [vmem:[#allocation7 + $0x68] sm:$0xff] %vm1375, %v1315
    %1389 = vst [vmem:[#allocation7 + $0x70] sm:$0xff] %v1316
    %1390 = vst.msk [vmem:[#allocation7 + $0x78] sm:$0xff] %vm1375, %v1317
    %1391 = vst [vmem:[#allocation7 + $0x80] sm:$0xff] %v1318
    %1392 = vst.msk [vmem:[#allocation7 + $0x88] sm:$0xff] %vm1375, %v1319
    %1393 = vst [vmem:[#allocation7 + $0x90] sm:$0xff] %v1320
    %1394 = vst.msk [vmem:[#allocation7 + $0x98] sm:$0xff] %vm1375, %v1321
    %1395 = vst [vmem:[#allocation7 + $0xa0] sm:$0xff] %v1322
    %1396 = vst.msk [vmem:[#allocation7 + $0xa8] sm:$0xff] %vm1375, %v1323
    %1397 = vst [vmem:[#allocation7 + $0xb0] sm:$0xff] %v1324
    %1398 = vst.msk [vmem:[#allocation7 + $0xb8] sm:$0xff] %vm1375, %v1325
    %1399 = vst [vmem:[#allocation7 + $0xc0] sm:$0xff] %v1326
    %1400 = vst.msk [vmem:[#allocation7 + $0xc8] sm:$0xff] %vm1375, %v1327
    %1401 = vst [vmem:[#allocation7 + $0xd0] sm:$0xff] %v1328
    %1402 = vst.msk [vmem:[#allocation7 + $0xd8] sm:$0xff] %vm1375, %v1329
    %1403 = vst [vmem:[#allocation7 + $0xe0] sm:$0xff] %v1330
    %1404 = vst.msk [vmem:[#allocation7 + $0xe8] sm:$0xff] %vm1375, %v1331
    %1405 = vst [vmem:[#allocation7 + $0xf0] sm:$0xff] %v1332
    %1406 = vst.msk [vmem:[#allocation7 + $0xf8] sm:$0xff] %vm1375, %v1333
    %1407 = vst [vmem:[#allocation7 + $0x100] sm:$0xff] %v1334
    %1408 = vst.msk [vmem:[#allocation7 + $0x108] sm:$0xff] %vm1375, %v1335
    %1409 = vst [vmem:[#allocation7 + $0x110] sm:$0xff] %v1336
    %1410 = vst.msk [vmem:[#allocation7 + $0x118] sm:$0xff] %vm1375, %v1337
    %1411 = vst [vmem:[#allocation7 + $0x120] sm:$0xff] %v1338
    %1412 = vst.msk [vmem:[#allocation7 + $0x128] sm:$0xff] %vm1375, %v1339
    %1413 = vst [vmem:[#allocation7 + $0x130] sm:$0xff] %v1340
    %1414 = vst.msk [vmem:[#allocation7 + $0x138] sm:$0xff] %vm1375, %v1341
    %1415 = vst [vmem:[#allocation7 + $0x140] sm:$0xff] %v1342
    %1416 = vst.msk [vmem:[#allocation7 + $0x148] sm:$0xff] %vm1375, %v1343
    %1417 = vst [vmem:[#allocation7 + $0x150] sm:$0xff] %v1344
    %1418 = vst.msk [vmem:[#allocation7 + $0x158] sm:$0xff] %vm1375, %v1345
    %1419 = vst [vmem:[#allocation7 + $0x160] sm:$0xff] %v1346
    %1420 = vst.msk [vmem:[#allocation7 + $0x168] sm:$0xff] %vm1375, %v1347
    %1421 = vst [vmem:[#allocation7 + $0x170] sm:$0xff] %v1348
    %1422 = vst.msk [vmem:[#allocation7 + $0x178] sm:$0xff] %vm1375, %v1349
    %1423 = vst [vmem:[#allocation7 + $0x180] sm:$0xff] %v1350
    %1424 = vst.msk [vmem:[#allocation7 + $0x188] sm:$0xff] %vm1375, %v1351
    %1425 = vst [vmem:[#allocation7 + $0x190] sm:$0xff] %v1352
    %1426 = vst.msk [vmem:[#allocation7 + $0x198] sm:$0xff] %vm1375, %v1353
    %1427 = vst [vmem:[#allocation7 + $0x1a0] sm:$0xff] %v1354
    %1428 = vst.msk [vmem:[#allocation7 + $0x1a8] sm:$0xff] %vm1375, %v1355
    %1429 = vst [vmem:[#allocation7 + $0x1b0] sm:$0xff] %v1356
    %1430 = vst.msk [vmem:[#allocation7 + $0x1b8] sm:$0xff] %vm1375, %v1357
    %1431 = vst [vmem:[#allocation7 + $0x1c0] sm:$0xff] %v1358
    %1432 = vst.msk [vmem:[#allocation7 + $0x1c8] sm:$0xff] %vm1375, %v1359
    %1433 = vst [vmem:[#allocation7 + $0x1d0] sm:$0xff] %v1360
    %1434 = vst.msk [vmem:[#allocation7 + $0x1d8] sm:$0xff] %vm1375, %v1361
    %1435 = vst [vmem:[#allocation7 + $0x1e0] sm:$0xff] %v1362
    %1436 = vst.msk [vmem:[#allocation7 + $0x1e8] sm:$0xff] %vm1375, %v1363
    %1437 = vst [vmem:[#allocation7 + $0x1f0] sm:$0xff] %v1364
    %1438 = vst.msk [vmem:[#allocation7 + $0x1f8] sm:$0xff] %vm1375, %v1365
    %1439 = vst [vmem:[#allocation7 + $0x200] sm:$0xff] %v1366
    %1440 = vst.msk [vmem:[#allocation7 + $0x208] sm:$0xff] %vm1375, %v1367
    %1441 = vst [vmem:[#allocation7 + $0x210] sm:$0xff] %v1368
    %1442 = vst.msk [vmem:[#allocation7 + $0x218] sm:$0xff] %vm1375, %v1369
    %1443 = vst [vmem:[#allocation7 + $0x220] sm:$0xff] %v1370
    %1444 = vst.msk [vmem:[#allocation7 + $0x228] sm:$0xff] %vm1375, %v1371
    %1445 = vst [vmem:[#allocation7 + $0x230] sm:$0xff] %v1372
    %1446 = vst.msk [vmem:[#allocation7 + $0x238] sm:$0xff] %vm1375, %v1373
    // Predicated region
    $region22: #{tpu_custom_call.1} parent=1 // pred_check
      _
    $region23: #{tpu_custom_call.1} parent=1 // pred_check_branch
      %1448 = sbr.rel (0) target = $region25
    $region24: #{tpu_custom_call.1} parent=1 // pred_region
      %1450 = vsyncadd [#allocation4], 0
      %s1451 = sshll.u32 [#allocation7], 4
      %s1452 = int_to_ptr.vmem [resolvable:$true] %s1451
      %s1453 = sshll.u32 %s3, 4
      %s1454 = int_to_ptr.hbm [resolvable:$true] %s1453
      %1459 = dma.vmem_to_hbm [thread:$0]  %s1452, 9216, %s1454, [#allocation4], 256, 256, 16
    $region25: #{tpu_custom_call.1} parent=1 // pred_fallthru
      _
    // Predicated region
    $region26: #{tpu_custom_call.1} parent=1 // pred_check
      _
    $region27: #{tpu_custom_call.1} parent=1 // pred_check_branch
      %1461 = sbr.rel (0) target = $region29
    $region28: #{tpu_custom_call.1} parent=1 // pred_region
      %1463 = dma.done [#allocation4], 9216
    $region29: #{tpu_custom_call.1} parent=1 // pred_fallthru
      _
    %1464 = vsyncpa [#allocation3], 1
    %1465 = vsyncpa [#allocation6], 1
    %1466 = vsyncpa [#allocation4], 1

</llo_original>
